<compile_context>
chip_gen: v7x
topology: tpu7x:2x2x1
jax: 0.10.0
libtpu: 0.0.40
codegen_flags: <defaults>
</compile_context>

<pallas_src>
import jax
import jax.numpy as jnp
from jax.experimental import pallas as pl
from jax.experimental.pallas import tpu as pltpu


def _round_up(a, b):
    return ((a + b - 1) // b) * b


def _block_diag(w, p):
    """Block-diagonal replication of w, p times: (p*in, p*out)."""
    if p == 1:
        return w
    kin, kout = w.shape
    big = jnp.zeros((p * kin, p * kout), w.dtype)
    for i in range(p):
        big = big.at[i * kin:(i + 1) * kin, i * kout:(i + 1) * kout].set(w)
    return big


def msa_trans_kernel(x_ref, avg_ref, gamma_ref, beta_ref, w1_ref, b1_ref,
                     w2_ref, b2_ref, o_ref):
    # x tile is (t, P*m_dim): P logical rows packed per 128-lane physical row.
    x = x_ref[...].astype(jnp.float32)

    # --- LayerNorm over each m_dim-wide lane group (eps matches PyTorch) ----
    # avg_ref = block_diag(full(1/m_dim)), so one matmul yields the per-group
    # mean already broadcast back to every lane of its group.
    avg = avg_ref[...]
    mean = jnp.dot(x, avg, preferred_element_type=jnp.float32)
    xc = x - mean
    var = jnp.dot(xc * xc, avg, preferred_element_type=jnp.float32)
    scale = jax.lax.rsqrt(var + 1e-5) * gamma_ref[...].astype(jnp.float32)
    xn = xc * scale + beta_ref[...].astype(jnp.float32)

    # --- linear1 (block-diagonal weights: K = P*m_dim, N = P*hidden) + ReLU --
    h = jnp.dot(xn, w1_ref[...].astype(jnp.float32),
                preferred_element_type=jnp.float32) + b1_ref[...].astype(jnp.float32)
    h = jnp.maximum(h, 0.0)

    # --- linear2 -------------------------------------------------------------
    y = jnp.dot(h, w2_ref[...].astype(jnp.float32),
                preferred_element_type=jnp.float32) + b2_ref[...].astype(jnp.float32)

    o_ref[...] = y.astype(o_ref.dtype)


def msa_trans(m, gamma, beta, w1, b1, w2, b2, *, tile_rows=256):
    """m: (..., m_dim). Returns same shape. `tile_rows` counts PACKED rows
    (each packed row carries P = 128 // m_dim logical rows)."""
    m_dim = m.shape[-1]
    hidden = w1.shape[1]
    orig_shape = m.shape
    x = m.reshape(-1, m_dim)
    rows = x.shape[0]

    # Lane-dense packing factor.
    if m_dim % 128 == 0:
        pack = 1
    elif 128 % m_dim == 0:
        pack = 128 // m_dim
    else:
        pack = 1  # TODO(synk): pad m_dim up to a multiple of 128 for non-divisor widths

    # Tile size (in packed rows): multiple of 8, no larger than the data.
    tile_rows = max(8, _round_up(tile_rows, 8))
    packed_rows = -(-rows // pack)
    t = min(tile_rows, _round_up(packed_rows, 8))
    padded_packed = _round_up(packed_rows, t)
    padded_rows = padded_packed * pack
    if padded_rows != rows:
        x = jnp.pad(x, ((0, padded_rows - rows), (0, 0)))
    xp = x.reshape(padded_packed, pack * m_dim)

    kp = pack * m_dim      # packed feature width (128 for m_dim=32)
    hp = pack * hidden     # packed hidden width (256 for hidden=64)

    # Block-diagonal lifted params (built once outside the kernel).
    avg = _block_diag(jnp.full((m_dim, m_dim), 1.0 / m_dim, jnp.float32), pack)
    w1b = _block_diag(w1.astype(jnp.float32), pack)
    w2b = _block_diag(w2.astype(jnp.float32), pack)
    gammab = jnp.tile(gamma.reshape(1, m_dim).astype(jnp.float32), (1, pack))
    betab = jnp.tile(beta.reshape(1, m_dim).astype(jnp.float32), (1, pack))
    b1b = jnp.tile(b1.reshape(1, hidden).astype(jnp.float32), (1, pack))
    b2b = jnp.tile(b2.reshape(1, m_dim).astype(jnp.float32), (1, pack))

    grid = (padded_packed // t,)

    out = pl.pallas_call(
        msa_trans_kernel,
        out_shape=jax.ShapeDtypeStruct((padded_packed, kp), m.dtype),
        grid_spec=pltpu.PrefetchScalarGridSpec(
            num_scalar_prefetch=0,
            grid=grid,
            in_specs=[
                pl.BlockSpec((t, kp), lambda i: (i, 0)),    # packed x rows
                pl.BlockSpec((kp, kp), lambda i: (0, 0)),   # LN averaging matrix
                pl.BlockSpec((1, kp), lambda i: (0, 0)),    # gamma (tiled)
                pl.BlockSpec((1, kp), lambda i: (0, 0)),    # beta  (tiled)
                pl.BlockSpec((kp, hp), lambda i: (0, 0)),   # w1 (block-diag)
                pl.BlockSpec((1, hp), lambda i: (0, 0)),    # b1 (tiled)
                pl.BlockSpec((hp, kp), lambda i: (0, 0)),   # w2 (block-diag)
                pl.BlockSpec((1, kp), lambda i: (0, 0)),    # b2 (tiled)
            ],
            out_specs=pl.BlockSpec((t, kp), lambda i: (i, 0)),
        ),
        compiler_params=pltpu.CompilerParams(
            dimension_semantics=("parallel",),
            vmem_limit_bytes=32 * 1024 * 1024,
        ),
    )(xp, avg, gammab, betab, w1b, b1b, w2b, b2b)

    out = out.reshape(padded_rows, m_dim)[:rows]
    return out.reshape(orig_shape)


def init_params(key, m_dim, c_expand=2):
    hidden = m_dim * c_expand
    k1, k2, k3, k4 = jax.random.split(key, 4)
    # LayerNorm params (PyTorch init: ones / zeros)
    gamma = jnp.ones((1, m_dim), jnp.float32)
    beta = jnp.zeros((1, m_dim), jnp.float32)
    # Linear weights stored as (in, out); small deterministic random init.
    w1 = jax.random.normal(k1, (m_dim, hidden), jnp.float32) * 0.02
    b1 = jax.random.normal(k2, (1, hidden), jnp.float32) * 0.02
    w2 = jax.random.normal(k3, (hidden, m_dim), jnp.float32) * 0.02
    b2 = jax.random.normal(k4, (1, m_dim), jnp.float32) * 0.02
    return gamma, beta, w1, b1, w2, b2


def msa_trans_ref(m, gamma, beta, w1, b1, w2, b2):
    """Pure-JAX reference matching the PyTorch forward."""
    mean = jnp.mean(m, axis=-1, keepdims=True)
    var = jnp.mean((m - mean) ** 2, axis=-1, keepdims=True)
    xn = (m - mean) * jax.lax.rsqrt(var + 1e-5) * gamma[0] + beta[0]
    h = jnp.maximum(xn @ w1 + b1[0], 0.0)
    return h @ w2 + b2[0]


if __name__ == "__main__":
    key = jax.random.PRNGKey(0)
    m_dim = 32
    c_expand = 2  # matches the constructor argument used for the Linears
    B, N_seq, N_res = 2, 8, 15   # 240 rows -> exercises the ragged/padding path

    k_in, k_p = jax.random.split(key)
    m = jax.random.normal(k_in, (B, N_seq, N_res, m_dim), jnp.float32)
    params = init_params(k_p, m_dim, c_expand)

    out = jax.block_until_ready(msa_trans(m, *params))

    # sanity check against the pure-JAX reference
    ref = msa_trans_ref(m, *params)
    assert out.shape == m.shape
    err = float(jnp.max(jnp.abs(out - ref)))
    assert err < 1e-4, f"mismatch vs reference: {err}"

    print("KERNEL_OK")
</pallas_src>

<mosaic_0001>
module attributes {stable_mosaic.version = 11 : i64} {
  func.func @msa_trans_kernel(%arg0: i32, %arg1: memref<64x128xf32, #tpu.memory_space<vmem>>, %arg2: memref<128x128xf32, #tpu.memory_space<vmem>>, %arg3: memref<1x128xf32, #tpu.memory_space<vmem>>, %arg4: memref<1x128xf32, #tpu.memory_space<vmem>>, %arg5: memref<128x256xf32, #tpu.memory_space<vmem>>, %arg6: memref<1x256xf32, #tpu.memory_space<vmem>>, %arg7: memref<256x128xf32, #tpu.memory_space<vmem>>, %arg8: memref<1x128xf32, #tpu.memory_space<vmem>>, %arg9: memref<64x128xf32, #tpu.memory_space<vmem>>) attributes {dimension_semantics = [#tpu.dimension_semantics<parallel>], iteration_bounds = array<i64: 1>, scalar_prefetch = 0 : i64, scratch_operands = 0 : i64, tpu.core_type = #tpu.core_type<tc>, window_params = [{transform_indices = @transform_0, window_bounds = array<i64: 64, 128>}, {pipeline_mode = #tpu.pipeline_mode<synchronous>, transform_indices = @transform_1, window_bounds = array<i64: 128, 128>}, {pipeline_mode = #tpu.pipeline_mode<synchronous>, transform_indices = @transform_2, window_bounds = array<i64: 1, 128>}, {pipeline_mode = #tpu.pipeline_mode<synchronous>, transform_indices = @transform_3, window_bounds = array<i64: 1, 128>}, {pipeline_mode = #tpu.pipeline_mode<synchronous>, transform_indices = @transform_4, window_bounds = array<i64: 128, 256>}, {pipeline_mode = #tpu.pipeline_mode<synchronous>, transform_indices = @transform_5, window_bounds = array<i64: 1, 256>}, {pipeline_mode = #tpu.pipeline_mode<synchronous>, transform_indices = @transform_6, window_bounds = array<i64: 256, 128>}, {pipeline_mode = #tpu.pipeline_mode<synchronous>, transform_indices = @transform_7, window_bounds = array<i64: 1, 128>}, {transform_indices = @transform_8, window_bounds = array<i64: 64, 128>}]} {
    %c0 = arith.constant 0 : index
    %c0_0 = arith.constant 0 : index
    %0 = vector.load %arg1[%c0, %c0_0] : memref<64x128xf32, #tpu.memory_space<vmem>>, vector<64x128xf32>
    %c0_1 = arith.constant 0 : index
    %c0_2 = arith.constant 0 : index
    %1 = vector.load %arg2[%c0_1, %c0_2] : memref<128x128xf32, #tpu.memory_space<vmem>>, vector<128x128xf32>
    %cst = arith.constant dense<0.000000e+00> : vector<64x128xf32>
    %2 = tpu.matmul %0, %1, %cst {dimension_numbers = #tpu.dot_dimension_numbers<[1], [0], [0], [1], [0, 0, 1, 1], [], []>} : vector<64x128xf32>, vector<128x128xf32>, vector<64x128xf32> -> vector<64x128xf32>
    %3 = arith.subf %0, %2 : vector<64x128xf32>
    %4 = arith.mulf %3, %3 : vector<64x128xf32>
    %cst_3 = arith.constant dense<0.000000e+00> : vector<64x128xf32>
    %5 = tpu.matmul %4, %1, %cst_3 {dimension_numbers = #tpu.dot_dimension_numbers<[1], [0], [0], [1], [0, 0, 1, 1], [], []>} : vector<64x128xf32>, vector<128x128xf32>, vector<64x128xf32> -> vector<64x128xf32>
    %cst_4 = arith.constant 9.99999974E-6 : f32
    %6 = vector.broadcast %cst_4 : f32 to vector<64x128xf32>
    %7 = arith.addf %5, %6 : vector<64x128xf32>
    %8 = math.rsqrt %7 : vector<64x128xf32>
    %c0_5 = arith.constant 0 : index
    %c0_6 = arith.constant 0 : index
    %9 = vector.load %arg3[%c0_5, %c0_6] : memref<1x128xf32, #tpu.memory_space<vmem>>, vector<1x128xf32>
    %10 = vector.broadcast %9 : vector<1x128xf32> to vector<64x128xf32>
    %11 = arith.mulf %8, %10 : vector<64x128xf32>
    %12 = arith.mulf %3, %11 : vector<64x128xf32>
    %c0_7 = arith.constant 0 : index
    %c0_8 = arith.constant 0 : index
    %13 = vector.load %arg4[%c0_7, %c0_8] : memref<1x128xf32, #tpu.memory_space<vmem>>, vector<1x128xf32>
    %14 = vector.broadcast %13 : vector<1x128xf32> to vector<64x128xf32>
    %15 = arith.addf %12, %14 : vector<64x128xf32>
    %c0_9 = arith.constant 0 : index
    %c0_10 = arith.constant 0 : index
    %16 = vector.load %arg5[%c0_9, %c0_10] : memref<128x256xf32, #tpu.memory_space<vmem>>, vector<128x256xf32>
    %cst_11 = arith.constant dense<0.000000e+00> : vector<64x256xf32>
    %17 = tpu.matmul %15, %16, %cst_11 {dimension_numbers = #tpu.dot_dimension_numbers<[1], [0], [0], [1], [0, 0, 1, 1], [], []>} : vector<64x128xf32>, vector<128x256xf32>, vector<64x256xf32> -> vector<64x256xf32>
    %c0_12 = arith.constant 0 : index
    %c0_13 = arith.constant 0 : index
    %18 = vector.load %arg6[%c0_12, %c0_13] : memref<1x256xf32, #tpu.memory_space<vmem>>, vector<1x256xf32>
    %19 = vector.broadcast %18 : vector<1x256xf32> to vector<64x256xf32>
    %20 = arith.addf %17, %19 : vector<64x256xf32>
    %cst_14 = arith.constant 0.000000e+00 : f32
    %21 = vector.broadcast %cst_14 : f32 to vector<64x256xf32>
    %22 = arith.maximumf %20, %21 : vector<64x256xf32>
    %c0_15 = arith.constant 0 : index
    %c0_16 = arith.constant 0 : index
    %23 = vector.load %arg7[%c0_15, %c0_16] : memref<256x128xf32, #tpu.memory_space<vmem>>, vector<256x128xf32>
    %cst_17 = arith.constant dense<0.000000e+00> : vector<64x128xf32>
    %24 = tpu.matmul %22, %23, %cst_17 {dimension_numbers = #tpu.dot_dimension_numbers<[1], [0], [0], [1], [0, 0, 1, 1], [], []>} : vector<64x256xf32>, vector<256x128xf32>, vector<64x128xf32> -> vector<64x128xf32>
    %c0_18 = arith.constant 0 : index
    %c0_19 = arith.constant 0 : index
    %25 = vector.load %arg8[%c0_18, %c0_19] : memref<1x128xf32, #tpu.memory_space<vmem>>, vector<1x128xf32>
    %26 = vector.broadcast %25 : vector<1x128xf32> to vector<64x128xf32>
    %27 = arith.addf %24, %26 : vector<64x128xf32>
    %c0_20 = arith.constant 0 : index
    %c0_21 = arith.constant 0 : index
    %28 = vector.load %arg9[%c0_20, %c0_21] : memref<64x128xf32, #tpu.memory_space<vmem>>, vector<64x128xf32>
    tpu.vector_store %arg9[%c0_20, %c0_21], %27 {strides = array<i32>} : memref<64x128xf32, #tpu.memory_space<vmem>>, vector<64x128xf32>,
    return
  }
  func.func @transform_0(%arg0: i32) -> (i32, i32) {
    %c0_i32 = arith.constant 0 : i32
    %c0_i32_0 = arith.constant 0 : i32
    return %arg0, %c0_i32 : i32, i32
  }
  func.func @transform_1(%arg0: i32) -> (i32, i32) {
    %c0_i32 = arith.constant 0 : i32
    %c0_i32_0 = arith.constant 0 : i32
    %c0_i32_1 = arith.constant 0 : i32
    return %c0_i32, %c0_i32_0 : i32, i32
  }
  func.func @transform_2(%arg0: i32) -> (i32, i32) {
    %c0_i32 = arith.constant 0 : i32
    %c0_i32_0 = arith.constant 0 : i32
    %c0_i32_1 = arith.constant 0 : i32
    return %c0_i32, %c0_i32_0 : i32, i32
  }
  func.func @transform_3(%arg0: i32) -> (i32, i32) {
    %c0_i32 = arith.constant 0 : i32
    %c0_i32_0 = arith.constant 0 : i32
    %c0_i32_1 = arith.constant 0 : i32
    return %c0_i32, %c0_i32_0 : i32, i32
  }
  func.func @transform_4(%arg0: i32) -> (i32, i32) {
    %c0_i32 = arith.constant 0 : i32
    %c0_i32_0 = arith.constant 0 : i32
    %c0_i32_1 = arith.constant 0 : i32
    return %c0_i32, %c0_i32_0 : i32, i32
  }
  func.func @transform_5(%arg0: i32) -> (i32, i32) {
    %c0_i32 = arith.constant 0 : i32
    %c0_i32_0 = arith.constant 0 : i32
    %c0_i32_1 = arith.constant 0 : i32
    return %c0_i32, %c0_i32_0 : i32, i32
  }
  func.func @transform_6(%arg0: i32) -> (i32, i32) {
    %c0_i32 = arith.constant 0 : i32
    %c0_i32_0 = arith.constant 0 : i32
    %c0_i32_1 = arith.constant 0 : i32
    return %c0_i32, %c0_i32_0 : i32, i32
  }
  func.func @transform_7(%arg0: i32) -> (i32, i32) {
    %c0_i32 = arith.constant 0 : i32
    %c0_i32_0 = arith.constant 0 : i32
    %c0_i32_1 = arith.constant 0 : i32
    return %c0_i32, %c0_i32_0 : i32, i32
  }
  func.func @transform_8(%arg0: i32) -> (i32, i32) {
    %c0_i32 = arith.constant 0 : i32
    %c0_i32_0 = arith.constant 0 : i32
    return %arg0, %c0_i32 : i32, i32
  }
}

</mosaic_0001>

<llo_original>
// kernel: tpu_custom_call.1
$region0: #{tpu_custom_call.1}
  #allocation0 [shape = 'u32[]', space=smem, size = 0x4, offset = 0x4, fixed_abs, tag = 'smem constant byte address 0x4 - core index']
  #allocation1 [shape = 'u32[144,128]{1,0:T(1,128)}', space=vmem, size = 0x12000, scoped, tag = 'internal scratch']
  %s0 = inlined_call_operand.hbm [shape: f32[64,128], index: 0, kind: input, shape index: {}]
  %s1 = inlined_call_operand.hbm [shape: f32[128,128], index: 1, kind: input, shape index: {}]
  %s2 = inlined_call_operand.vmem [shape: f32[1,128], index: 2, kind: input, shape index: {}]
  %s3 = inlined_call_operand.vmem [shape: f32[1,128], index: 3, kind: input, shape index: {}]
  %s4 = inlined_call_operand.hbm [shape: f32[128,256], index: 4, kind: input, shape index: {}]
  %s5 = inlined_call_operand.vmem [shape: f32[1,256], index: 5, kind: input, shape index: {}]
  %s6 = inlined_call_operand.hbm [shape: f32[256,128], index: 6, kind: input, shape index: {}]
  %s7 = inlined_call_operand.vmem [shape: f32[1,128], index: 7, kind: input, shape index: {}]
  %s8 = inlined_call_operand.hbm [shape: f32[64,128], index: 8, kind: output, shape index: {}]
  %s9 = sld [smem:[#allocation0]]
  $region58: #{tpu_custom_call.1} parent=0
    _
  %s11 = ssub.s32 1, %s9
  %s12 = scalar_select 0, %s11, %s9
  $region1: #{tpu_custom_call.1} parent=0
    #allocation2 [shape = 'u8[32768]{0}', space=vmem, size = 0x8000, scoped, tag = 'input window, operand 0, single buffered']
    #allocation3 [shape = 's32[1]{0}', space=sflag, size = 0x4, scoped, tag = 'scoped memory for tpu_custom_call.1']
    #allocation4 [shape = 's32[1]{0}', space=sflag, size = 0x4, scoped, tag = 'scoped memory for tpu_custom_call.1']
    #allocation5 [shape = 'u8[65536]{0}', space=vmem, size = 0x10000, scoped, tag = 'input window, operand 1, single buffered']
    #allocation6 [shape = 's32[1]{0}', space=sflag, size = 0x4, scoped, tag = 'scoped memory for tpu_custom_call.1']
    #allocation7 [shape = 'u8[131072]{0}', space=vmem, size = 0x20000, scoped, tag = 'input window, operand 4, single buffered']
    #allocation8 [shape = 'u8[131072]{0}', space=vmem, size = 0x20000, scoped, tag = 'input window, operand 6, single buffered']
    #allocation9 [shape = 's32[1]{0}', space=sflag, size = 0x4, scoped, tag = 'scoped memory for tpu_custom_call.1']
    #allocation10 [shape = 'u8[32768]{0}', space=vmem, size = 0x8000, scoped, tag = 'output window, operand 0, single buffered']
    %13 = vsyncpa [#allocation3], 0
    %14 = vsyncpa [#allocation6], 0
    %15 = vsyncpa [#allocation9], 0
    %16 = vsyncpa [#allocation4], 0
    // Predicated region
    $region2: #{tpu_custom_call.1} parent=1 // pred_check
      _
    $region3: #{tpu_custom_call.1} parent=1 // pred_check_branch
      %18 = sbr.rel (0) target = $region5
    $region4: #{tpu_custom_call.1} parent=1 // pred_region
      %s20 = ssub.s32 1024, 1024
      %21 = vsyncadd [#allocation3], %s20
      %s22 = sshll.u32 [#allocation2], 4
      %s23 = int_to_ptr.vmem [resolvable:$true] %s22
      %28 = dma.hbm_to_vmem [thread:$0]  %s0, 1024, %s23, [#allocation3], 128, 128, 8
    $region5: #{tpu_custom_call.1} parent=1 // pred_fallthru
      _
    // Predicated region
    $region6: #{tpu_custom_call.1} parent=1 // pred_check
      _
    $region7: #{tpu_custom_call.1} parent=1 // pred_check_branch
      %30 = sbr.rel (0) target = $region9
    $region8: #{tpu_custom_call.1} parent=1 // pred_region
      %s32 = ssub.s32 2048, 2048
      %33 = vsyncadd [#allocation6], %s32
      %s34 = sshll.u32 [#allocation5], 4
      %s35 = int_to_ptr.vmem [resolvable:$true] %s34
      %40 = dma.hbm_to_vmem [thread:$0]  %s1, 2048, %s35, [#allocation6], 128, 128, 8
    $region9: #{tpu_custom_call.1} parent=1 // pred_fallthru
      _
    // Predicated region
    $region10: #{tpu_custom_call.1} parent=1 // pred_check
      _
    $region11: #{tpu_custom_call.1} parent=1 // pred_check_branch
      %42 = sbr.rel (0) target = $region13
    $region12: #{tpu_custom_call.1} parent=1 // pred_region
      _
    $region13: #{tpu_custom_call.1} parent=1 // pred_fallthru
      _
    // Predicated region
    $region14: #{tpu_custom_call.1} parent=1 // pred_check
      _
    $region15: #{tpu_custom_call.1} parent=1 // pred_check_branch
      %44 = sbr.rel (0) target = $region17
    $region16: #{tpu_custom_call.1} parent=1 // pred_region
      _
    $region17: #{tpu_custom_call.1} parent=1 // pred_fallthru
      _
    // Predicated region
    $region18: #{tpu_custom_call.1} parent=1 // pred_check
      _
    $region19: #{tpu_custom_call.1} parent=1 // pred_check_branch
      %46 = sbr.rel (0) target = $region21
    $region20: #{tpu_custom_call.1} parent=1 // pred_region
      %s48 = ssub.s32 4096, 4096
      %49 = vsyncadd [#allocation6], %s48
      %s50 = sshll.u32 [#allocation7], 4
      %s51 = int_to_ptr.vmem [resolvable:$true] %s50
      %56 = dma.hbm_to_vmem [thread:$0]  %s4, 4096, %s51, [#allocation6], 256, 256, 16
    $region21: #{tpu_custom_call.1} parent=1 // pred_fallthru
      _
    // Predicated region
    $region22: #{tpu_custom_call.1} parent=1 // pred_check
      _
    $region23: #{tpu_custom_call.1} parent=1 // pred_check_branch
      %58 = sbr.rel (0) target = $region25
    $region24: #{tpu_custom_call.1} parent=1 // pred_region
      _
    $region25: #{tpu_custom_call.1} parent=1 // pred_fallthru
      _
    // Predicated region
    $region26: #{tpu_custom_call.1} parent=1 // pred_check
      _
    $region27: #{tpu_custom_call.1} parent=1 // pred_check_branch
      %60 = sbr.rel (0) target = $region29
    $region28: #{tpu_custom_call.1} parent=1 // pred_region
      %s62 = ssub.s32 4096, 4096
      %63 = vsyncadd [#allocation9], %s62
      %s64 = sshll.u32 [#allocation8], 4
      %s65 = int_to_ptr.vmem [resolvable:$true] %s64
      %70 = dma.hbm_to_vmem [thread:$0]  %s6, 4096, %s65, [#allocation9], 128, 128, 8
    $region29: #{tpu_custom_call.1} parent=1 // pred_fallthru
      _
    // Predicated region
    $region30: #{tpu_custom_call.1} parent=1 // pred_check
      _
    $region31: #{tpu_custom_call.1} parent=1 // pred_check_branch
      %72 = sbr.rel (0) target = $region33
    $region32: #{tpu_custom_call.1} parent=1 // pred_region
      _
    $region33: #{tpu_custom_call.1} parent=1 // pred_fallthru
      _
    // Predicated region
    $region34: #{tpu_custom_call.1} parent=1 // pred_check
      _
    $region35: #{tpu_custom_call.1} parent=1 // pred_check_branch
      %74 = sbr.rel (0) target = $region37
    $region36: #{tpu_custom_call.1} parent=1 // pred_region
      %75 = dma.done [#allocation3], 1024
    $region37: #{tpu_custom_call.1} parent=1 // pred_fallthru
      _
    // Predicated region
    $region38: #{tpu_custom_call.1} parent=1 // pred_check
      _
    $region39: #{tpu_custom_call.1} parent=1 // pred_check_branch
      %77 = sbr.rel (0) target = $region41
    $region40: #{tpu_custom_call.1} parent=1 // pred_region
      %78 = dma.done [#allocation6], 2048
    $region41: #{tpu_custom_call.1} parent=1 // pred_fallthru
      _
    // Predicated region
    $region42: #{tpu_custom_call.1} parent=1 // pred_check
      _
    $region43: #{tpu_custom_call.1} parent=1 // pred_check_branch
      %80 = sbr.rel (0) target = $region45
    $region44: #{tpu_custom_call.1} parent=1 // pred_region
      %81 = dma.done [#allocation6], 4096
    $region45: #{tpu_custom_call.1} parent=1 // pred_fallthru
      _
    // Predicated region
    $region46: #{tpu_custom_call.1} parent=1 // pred_check
      _
    $region47: #{tpu_custom_call.1} parent=1 // pred_check_branch
      %83 = sbr.rel (0) target = $region49
    $region48: #{tpu_custom_call.1} parent=1 // pred_region
      %84 = dma.done [#allocation9], 4096
    $region49: #{tpu_custom_call.1} parent=1 // pred_fallthru
      _
    %v85 = vld [vmem:[#allocation2] sm:$0xff]
    %v86 = vld [vmem:[#allocation2 + $0x8] sm:$0xff]
    %v87 = vld [vmem:[#allocation2 + $0x10] sm:$0xff]
    %v88 = vld [vmem:[#allocation2 + $0x18] sm:$0xff]
    %v89 = vld [vmem:[#allocation2 + $0x20] sm:$0xff]
    %v90 = vld [vmem:[#allocation2 + $0x28] sm:$0xff]
    %v91 = vld [vmem:[#allocation2 + $0x30] sm:$0xff]
    %v92 = vld [vmem:[#allocation2 + $0x38] sm:$0xff]
    %v93 = vld [vmem:[#allocation5] sm:$0xff]
    %v94 = vld [vmem:[#allocation5 + $0x8] sm:$0xff]
    %v95 = vld [vmem:[#allocation5 + $0x10] sm:$0xff]
    %v96 = vld [vmem:[#allocation5 + $0x18] sm:$0xff]
    %v97 = vld [vmem:[#allocation5 + $0x20] sm:$0xff]
    %v98 = vld [vmem:[#allocation5 + $0x28] sm:$0xff]
    %v99 = vld [vmem:[#allocation5 + $0x30] sm:$0xff]
    %v100 = vld [vmem:[#allocation5 + $0x38] sm:$0xff]
    %v101 = vld [vmem:[#allocation5 + $0x40] sm:$0xff]
    %v102 = vld [vmem:[#allocation5 + $0x48] sm:$0xff]
    %v103 = vld [vmem:[#allocation5 + $0x50] sm:$0xff]
    %v104 = vld [vmem:[#allocation5 + $0x58] sm:$0xff]
    %v105 = vld [vmem:[#allocation5 + $0x60] sm:$0xff]
    %v106 = vld [vmem:[#allocation5 + $0x68] sm:$0xff]
    %v107 = vld [vmem:[#allocation5 + $0x70] sm:$0xff]
    %v108 = vld [vmem:[#allocation5 + $0x78] sm:$0xff]
    %109 = vmatprep.subr.mxu0 0.0
    %110 = vmatpush1.msra.mxu0 %v93
    %111 = vmatprep.subr.mxu0 0.0
    %112 = vmatpush1.msra.mxu0 %v94
    %113 = vmatprep.subr.mxu0 0.0
    %114 = vmatpush1.msra.mxu0 %v95
    %115 = vmatprep.subr.mxu0 0.0
    %116 = vmatpush1.msra.mxu0 %v96
    %117 = vmatprep.subr.mxu0 0.0
    %118 = vmatpush1.msra.mxu0 %v97
    %119 = vmatprep.subr.mxu0 0.0
    %120 = vmatpush1.msra.mxu0 %v98
    %121 = vmatprep.subr.mxu0 0.0
    %122 = vmatpush1.msra.mxu0 %v99
    %123 = vmatprep.subr.mxu0 0.0
    %124 = vmatpush1.msra.mxu0 %v100
    %125 = vmatprep.subr.mxu0 0.0
    %126 = vmatpush1.msra.mxu0 %v101
    %127 = vmatprep.subr.mxu0 0.0
    %128 = vmatpush1.msra.mxu0 %v102
    %129 = vmatprep.subr.mxu0 0.0
    %130 = vmatpush1.msra.mxu0 %v103
    %131 = vmatprep.subr.mxu0 0.0
    %132 = vmatpush1.msra.mxu0 %v104
    %133 = vmatprep.subr.mxu0 0.0
    %134 = vmatpush1.msra.mxu0 %v105
    %135 = vmatprep.subr.mxu0 0.0
    %136 = vmatpush1.msra.mxu0 %v106
    %137 = vmatprep.subr.mxu0 0.0
    %138 = vmatpush1.msra.mxu0 %v107
    %139 = vmatprep.subr.mxu0 0.0
    %140 = vmatpush1.msra.mxu0 %v108
    %141 = vmatprep.subr.mxu0 0.0
    %142 = vmatpush1.msra.mxu0 0.0
    %143 = vmatprep.subr.mxu0 0.0
    %144 = vmatpush1.msra.mxu0 0.0
    %145 = vmatprep.subr.mxu0 0.0
    %146 = vmatpush1.msra.mxu0 0.0
    %147 = vmatprep.subr.mxu0 0.0
    %148 = vmatpush1.msra.mxu0 0.0
    %149 = vmatprep.subr.mxu0 0.0
    %150 = vmatpush1.msra.mxu0 0.0
    %151 = vmatprep.subr.mxu0 0.0
    %152 = vmatpush1.msra.mxu0 0.0
    %153 = vmatprep.subr.mxu0 0.0
    %154 = vmatpush1.msra.mxu0 0.0
    %155 = vmatprep.subr.mxu0 0.0
    %156 = vmatpush1.msra.mxu0 0.0
    %157 = vmatprep.subr.mxu0 0.0
    %158 = vmatpush1.msra.mxu0 0.0
    %159 = vmatprep.subr.mxu0 0.0
    %160 = vmatpush1.msra.mxu0 0.0
    %161 = vmatprep.subr.mxu0 0.0
    %162 = vmatpush1.msra.mxu0 0.0
    %163 = vmatprep.subr.mxu0 0.0
    %164 = vmatpush1.msra.mxu0 0.0
    %165 = vmatprep.subr.mxu0 0.0
    %166 = vmatpush1.msra.mxu0 0.0
    %167 = vmatprep.subr.mxu0 0.0
    %168 = vmatpush1.msra.mxu0 0.0
    %169 = vmatprep.subr.mxu0 0.0
    %170 = vmatpush1.msra.mxu0 0.0
    %171 = vmatprep.subr.mxu0 0.0
    %172 = vmatpush1.msra.mxu0 0.0
    %173 = vmatprep.mubr.f32.mxu0 0.0
    %174 = vmatmul.mubr.f32.gmra.mrb[0].mxu0 %v85
    %v175 = vpop.f32.mrb[0].mxu0
    %v176 = vadd.f32 0.0, %v175
    %v177 = vpop.f32.mrb[0].mxu0
    %178 = vmatprep.mubr.f32.mxu0 0.0
    %179 = vmatmul.mubr.f32.gmra.mrb[0].mxu0 %v86
    %v180 = vpop.f32.mrb[0].mxu0
    %v181 = vadd.f32 0.0, %v180
    %v182 = vpop.f32.mrb[0].mxu0
    %183 = vmatprep.mubr.f32.mxu0 0.0
    %184 = vmatmul.mubr.f32.gmra.mrb[0].mxu0 %v87
    %v185 = vpop.f32.mrb[0].mxu0
    %v186 = vadd.f32 0.0, %v185
    %v187 = vpop.f32.mrb[0].mxu0
    %188 = vmatprep.mubr.f32.mxu0 0.0
    %189 = vmatmul.mubr.f32.gmra.mrb[0].mxu0 %v88
    %v190 = vpop.f32.mrb[0].mxu0
    %v191 = vadd.f32 0.0, %v190
    %v192 = vpop.f32.mrb[0].mxu0
    %193 = vmatprep.mubr.f32.mxu0 0.0
    %194 = vmatmul.mubr.f32.gmra.mrb[0].mxu0 %v89
    %v195 = vpop.f32.mrb[0].mxu0
    %v196 = vadd.f32 0.0, %v195
    %v197 = vpop.f32.mrb[0].mxu0
    %198 = vmatprep.mubr.f32.mxu0 0.0
    %199 = vmatmul.mubr.f32.gmra.mrb[0].mxu0 %v90
    %v200 = vpop.f32.mrb[0].mxu0
    %v201 = vadd.f32 0.0, %v200
    %v202 = vpop.f32.mrb[0].mxu0
    %203 = vmatprep.mubr.f32.mxu0 0.0
    %204 = vmatmul.mubr.f32.gmra.mrb[0].mxu0 %v91
    %v205 = vpop.f32.mrb[0].mxu0
    %v206 = vadd.f32 0.0, %v205
    %v207 = vpop.f32.mrb[0].mxu0
    %208 = vmatprep.mubr.f32.mxu0 0.0
    %209 = vmatmul.mubr.f32.gmra.mrb[0].mxu0 %v92
    %v210 = vpop.f32.mrb[0].mxu0
    %v211 = vadd.f32 0.0, %v210
    %v212 = vpop.f32.mrb[0].mxu0
    %213 = vdwg.mxu0
    %v214 = vsub.f32 %v85, %v176
    %v215 = vsub.f32 %v86, %v181
    %v216 = vsub.f32 %v87, %v186
    %v217 = vsub.f32 %v88, %v191
    %v218 = vsub.f32 %v89, %v196
    %v219 = vsub.f32 %v90, %v201
    %v220 = vsub.f32 %v91, %v206
    %v221 = vsub.f32 %v92, %v211
    %v222 = vmul.f32 %v214, %v214
    %v223 = vmul.f32 %v215, %v215
    %v224 = vmul.f32 %v216, %v216
    %v225 = vmul.f32 %v217, %v217
    %v226 = vmul.f32 %v218, %v218
    %v227 = vmul.f32 %v219, %v219
    %v228 = vmul.f32 %v220, %v220
    %v229 = vmul.f32 %v221, %v221
    %230 = vmatprep.subr.mxu0 0.0
    %231 = vmatpush1.msra.mxu0 %v93
    %232 = vmatprep.subr.mxu0 0.0
    %233 = vmatpush1.msra.mxu0 %v94
    %234 = vmatprep.subr.mxu0 0.0
    %235 = vmatpush1.msra.mxu0 %v95
    %236 = vmatprep.subr.mxu0 0.0
    %237 = vmatpush1.msra.mxu0 %v96
    %238 = vmatprep.subr.mxu0 0.0
    %239 = vmatpush1.msra.mxu0 %v97
    %240 = vmatprep.subr.mxu0 0.0
    %241 = vmatpush1.msra.mxu0 %v98
    %242 = vmatprep.subr.mxu0 0.0
    %243 = vmatpush1.msra.mxu0 %v99
    %244 = vmatprep.subr.mxu0 0.0
    %245 = vmatpush1.msra.mxu0 %v100
    %246 = vmatprep.subr.mxu0 0.0
    %247 = vmatpush1.msra.mxu0 %v101
    %248 = vmatprep.subr.mxu0 0.0
    %249 = vmatpush1.msra.mxu0 %v102
    %250 = vmatprep.subr.mxu0 0.0
    %251 = vmatpush1.msra.mxu0 %v103
    %252 = vmatprep.subr.mxu0 0.0
    %253 = vmatpush1.msra.mxu0 %v104
    %254 = vmatprep.subr.mxu0 0.0
    %255 = vmatpush1.msra.mxu0 %v105
    %256 = vmatprep.subr.mxu0 0.0
    %257 = vmatpush1.msra.mxu0 %v106
    %258 = vmatprep.subr.mxu0 0.0
    %259 = vmatpush1.msra.mxu0 %v107
    %260 = vmatprep.subr.mxu0 0.0
    %261 = vmatpush1.msra.mxu0 %v108
    %262 = vmatprep.subr.mxu0 0.0
    %263 = vmatpush1.msra.mxu0 0.0
    %264 = vmatprep.subr.mxu0 0.0
    %265 = vmatpush1.msra.mxu0 0.0
    %266 = vmatprep.subr.mxu0 0.0
    %267 = vmatpush1.msra.mxu0 0.0
    %268 = vmatprep.subr.mxu0 0.0
    %269 = vmatpush1.msra.mxu0 0.0
    %270 = vmatprep.subr.mxu0 0.0
    %271 = vmatpush1.msra.mxu0 0.0
    %272 = vmatprep.subr.mxu0 0.0
    %273 = vmatpush1.msra.mxu0 0.0
    %274 = vmatprep.subr.mxu0 0.0
    %275 = vmatpush1.msra.mxu0 0.0
    %276 = vmatprep.subr.mxu0 0.0
    %277 = vmatpush1.msra.mxu0 0.0
    %278 = vmatprep.subr.mxu0 0.0
    %279 = vmatpush1.msra.mxu0 0.0
    %280 = vmatprep.subr.mxu0 0.0
    %281 = vmatpush1.msra.mxu0 0.0
    %282 = vmatprep.subr.mxu0 0.0
    %283 = vmatpush1.msra.mxu0 0.0
    %284 = vmatprep.subr.mxu0 0.0
    %285 = vmatpush1.msra.mxu0 0.0
    %286 = vmatprep.subr.mxu0 0.0
    %287 = vmatpush1.msra.mxu0 0.0
    %288 = vmatprep.subr.mxu0 0.0
    %289 = vmatpush1.msra.mxu0 0.0
    %290 = vmatprep.subr.mxu0 0.0
    %291 = vmatpush1.msra.mxu0 0.0
    %292 = vmatprep.subr.mxu0 0.0
    %293 = vmatpush1.msra.mxu0 0.0
    %294 = vmatprep.mubr.f32.mxu0 0.0
    %295 = vmatmul.mubr.f32.gmra.mrb[0].mxu0 %v222
    %v296 = vpop.f32.mrb[0].mxu0
    %v297 = vadd.f32 1e-05, %v296
    %v298 = vpop.f32.mrb[0].mxu0
    %299 = vmatprep.mubr.f32.mxu0 0.0
    %300 = vmatmul.mubr.f32.gmra.mrb[0].mxu0 %v223
    %v301 = vpop.f32.mrb[0].mxu0
    %v302 = vadd.f32 1e-05, %v301
    %v303 = vpop.f32.mrb[0].mxu0
    %304 = vmatprep.mubr.f32.mxu0 0.0
    %305 = vmatmul.mubr.f32.gmra.mrb[0].mxu0 %v224
    %v306 = vpop.f32.mrb[0].mxu0
    %v307 = vadd.f32 1e-05, %v306
    %v308 = vpop.f32.mrb[0].mxu0
    %309 = vmatprep.mubr.f32.mxu0 0.0
    %310 = vmatmul.mubr.f32.gmra.mrb[0].mxu0 %v225
    %v311 = vpop.f32.mrb[0].mxu0
    %v312 = vadd.f32 1e-05, %v311
    %v313 = vpop.f32.mrb[0].mxu0
    %314 = vmatprep.mubr.f32.mxu0 0.0
    %315 = vmatmul.mubr.f32.gmra.mrb[0].mxu0 %v226
    %v316 = vpop.f32.mrb[0].mxu0
    %v317 = vadd.f32 1e-05, %v316
    %v318 = vpop.f32.mrb[0].mxu0
    %319 = vmatprep.mubr.f32.mxu0 0.0
    %320 = vmatmul.mubr.f32.gmra.mrb[0].mxu0 %v227
    %v321 = vpop.f32.mrb[0].mxu0
    %v322 = vadd.f32 1e-05, %v321
    %v323 = vpop.f32.mrb[0].mxu0
    %324 = vmatprep.mubr.f32.mxu0 0.0
    %325 = vmatmul.mubr.f32.gmra.mrb[0].mxu0 %v228
    %v326 = vpop.f32.mrb[0].mxu0
    %v327 = vadd.f32 1e-05, %v326
    %v328 = vpop.f32.mrb[0].mxu0
    %329 = vmatprep.mubr.f32.mxu0 0.0
    %330 = vmatmul.mubr.f32.gmra.mrb[0].mxu0 %v229
    %v331 = vpop.f32.mrb[0].mxu0
    %v332 = vadd.f32 1e-05, %v331
    %v333 = vpop.f32.mrb[0].mxu0
    %334 = vdwg.mxu0
    %v335 = vrsqrt.pop %v297
    %v336 = vrsqrt.pop %v302
    %v337 = vrsqrt.pop %v307
    %v338 = vrsqrt.pop %v312
    %v339 = vrsqrt.pop %v317
    %v340 = vrsqrt.pop %v322
    %v341 = vrsqrt.pop %v327
    %v342 = vrsqrt.pop %v332
    %v343 = vld [vmem:[%s2] sm:$0x1]
    %v345 = vlaneseq
    %v346 = vshrl.u32 %v345, 7
    %v347 = vsub.s32 0, %v346
    %v348 = vrot.slane %v343, %v347
    %v350 = vmul.f32 %v335, %v348
    %v351 = vmul.f32 %v336, %v348
    %v352 = vmul.f32 %v337, %v348
    %v353 = vmul.f32 %v338, %v348
    %v354 = vmul.f32 %v339, %v348
    %v355 = vmul.f32 %v340, %v348
    %v356 = vmul.f32 %v341, %v348
    %v357 = vmul.f32 %v342, %v348
    %v358 = vmul.f32 %v214, %v350
    %v359 = vmul.f32 %v215, %v351
    %v360 = vmul.f32 %v216, %v352
    %v361 = vmul.f32 %v217, %v353
    %v362 = vmul.f32 %v218, %v354
    %v363 = vmul.f32 %v219, %v355
    %v364 = vmul.f32 %v220, %v356
    %v365 = vmul.f32 %v221, %v357
    %v366 = vld [vmem:[%s3] sm:$0x1]
    %v368 = vlaneseq
    %v369 = vshrl.u32 %v368, 7
    %v370 = vsub.s32 0, %v369
    %v371 = vrot.slane %v366, %v370
    %v373 = vadd.f32 %v358, %v371
    %v374 = vadd.f32 %v359, %v371
    %v375 = vadd.f32 %v360, %v371
    %v376 = vadd.f32 %v361, %v371
    %v377 = vadd.f32 %v362, %v371
    %v378 = vadd.f32 %v363, %v371
    %v379 = vadd.f32 %v364, %v371
    %v380 = vadd.f32 %v365, %v371
    %v381 = vld [vmem:[#allocation7] sm:$0xff]
    %v382 = vld [vmem:[#allocation7 + $0x8] sm:$0xff]
    %v383 = vld [vmem:[#allocation7 + $0x10] sm:$0xff]
    %v384 = vld [vmem:[#allocation7 + $0x18] sm:$0xff]
    %v385 = vld [vmem:[#allocation7 + $0x20] sm:$0xff]
    %v386 = vld [vmem:[#allocation7 + $0x28] sm:$0xff]
    %v387 = vld [vmem:[#allocation7 + $0x30] sm:$0xff]
    %v388 = vld [vmem:[#allocation7 + $0x38] sm:$0xff]
    %v389 = vld [vmem:[#allocation7 + $0x40] sm:$0xff]
    %v390 = vld [vmem:[#allocation7 + $0x48] sm:$0xff]
    %v391 = vld [vmem:[#allocation7 + $0x50] sm:$0xff]
    %v392 = vld [vmem:[#allocation7 + $0x58] sm:$0xff]
    %v393 = vld [vmem:[#allocation7 + $0x60] sm:$0xff]
    %v394 = vld [vmem:[#allocation7 + $0x68] sm:$0xff]
    %v395 = vld [vmem:[#allocation7 + $0x70] sm:$0xff]
    %v396 = vld [vmem:[#allocation7 + $0x78] sm:$0xff]
    %v397 = vld [vmem:[#allocation7 + $0x80] sm:$0xff]
    %v398 = vld [vmem:[#allocation7 + $0x88] sm:$0xff]
    %v399 = vld [vmem:[#allocation7 + $0x90] sm:$0xff]
    %v400 = vld [vmem:[#allocation7 + $0x98] sm:$0xff]
    %v401 = vld [vmem:[#allocation7 + $0xa0] sm:$0xff]
    %v402 = vld [vmem:[#allocation7 + $0xa8] sm:$0xff]
    %v403 = vld [vmem:[#allocation7 + $0xb0] sm:$0xff]
    %v404 = vld [vmem:[#allocation7 + $0xb8] sm:$0xff]
    %v405 = vld [vmem:[#allocation7 + $0xc0] sm:$0xff]
    %v406 = vld [vmem:[#allocation7 + $0xc8] sm:$0xff]
    %v407 = vld [vmem:[#allocation7 + $0xd0] sm:$0xff]
    %v408 = vld [vmem:[#allocation7 + $0xd8] sm:$0xff]
    %v409 = vld [vmem:[#allocation7 + $0xe0] sm:$0xff]
    %v410 = vld [vmem:[#allocation7 + $0xe8] sm:$0xff]
    %v411 = vld [vmem:[#allocation7 + $0xf0] sm:$0xff]
    %v412 = vld [vmem:[#allocation7 + $0xf8] sm:$0xff]
    %v413 = vld [vmem:[%s5] sm:$0x3]
    %v415 = vlaneseq
    %v416 = vshrl.u32 %v415, 7
    %v417 = vsub.s32 0, %v416
    %v418 = vrot.slane %v413, %v417
    %v419 = vlaneseq
    %v420 = vshrl.u32 %v419, 7
    %v421 = vsub.s32 1, %v420
    %v422 = vrot.slane %v413, %v421
    %425 = vmatprep.subr.mxu0 %v382
    %426 = vmatpush1.msra.mxu0 %v381
    %427 = vmatprep.subr.mxu0 %v384
    %428 = vmatpush1.msra.mxu0 %v383
    %429 = vmatprep.subr.mxu0 %v386
    %430 = vmatpush1.msra.mxu0 %v385
    %431 = vmatprep.subr.mxu0 %v388
    %432 = vmatpush1.msra.mxu0 %v387
    %433 = vmatprep.subr.mxu0 %v390
    %434 = vmatpush1.msra.mxu0 %v389
    %435 = vmatprep.subr.mxu0 %v392
    %436 = vmatpush1.msra.mxu0 %v391
    %437 = vmatprep.subr.mxu0 %v394
    %438 = vmatpush1.msra.mxu0 %v393
    %439 = vmatprep.subr.mxu0 %v396
    %440 = vmatpush1.msra.mxu0 %v395
    %441 = vmatprep.subr.mxu0 %v398
    %442 = vmatpush1.msra.mxu0 %v397
    %443 = vmatprep.subr.mxu0 %v400
    %444 = vmatpush1.msra.mxu0 %v399
    %445 = vmatprep.subr.mxu0 %v402
    %446 = vmatpush1.msra.mxu0 %v401
    %447 = vmatprep.subr.mxu0 %v404
    %448 = vmatpush1.msra.mxu0 %v403
    %449 = vmatprep.subr.mxu0 %v406
    %450 = vmatpush1.msra.mxu0 %v405
    %451 = vmatprep.subr.mxu0 %v408
    %452 = vmatpush1.msra.mxu0 %v407
    %453 = vmatprep.subr.mxu0 %v410
    %454 = vmatpush1.msra.mxu0 %v409
    %455 = vmatprep.subr.mxu0 %v412
    %456 = vmatpush1.msra.mxu0 %v411
    %457 = vmatprep.subr.mxu0 0.0
    %458 = vmatpush1.msra.mxu0 0.0
    %459 = vmatprep.subr.mxu0 0.0
    %460 = vmatpush1.msra.mxu0 0.0
    %461 = vmatprep.subr.mxu0 0.0
    %462 = vmatpush1.msra.mxu0 0.0
    %463 = vmatprep.subr.mxu0 0.0
    %464 = vmatpush1.msra.mxu0 0.0
    %465 = vmatprep.subr.mxu0 0.0
    %466 = vmatpush1.msra.mxu0 0.0
    %467 = vmatprep.subr.mxu0 0.0
    %468 = vmatpush1.msra.mxu0 0.0
    %469 = vmatprep.subr.mxu0 0.0
    %470 = vmatpush1.msra.mxu0 0.0
    %471 = vmatprep.subr.mxu0 0.0
    %472 = vmatpush1.msra.mxu0 0.0
    %473 = vmatprep.subr.mxu0 0.0
    %474 = vmatpush1.msra.mxu0 0.0
    %475 = vmatprep.subr.mxu0 0.0
    %476 = vmatpush1.msra.mxu0 0.0
    %477 = vmatprep.subr.mxu0 0.0
    %478 = vmatpush1.msra.mxu0 0.0
    %479 = vmatprep.subr.mxu0 0.0
    %480 = vmatpush1.msra.mxu0 0.0
    %481 = vmatprep.subr.mxu0 0.0
    %482 = vmatpush1.msra.mxu0 0.0
    %483 = vmatprep.subr.mxu0 0.0
    %484 = vmatpush1.msra.mxu0 0.0
    %485 = vmatprep.subr.mxu0 0.0
    %486 = vmatpush1.msra.mxu0 0.0
    %487 = vmatprep.subr.mxu0 0.0
    %488 = vmatpush1.msra.mxu0 0.0
    %489 = vmatprep.mubr.f32.mxu0 0.0
    %490 = vmatmul.mubr.f32.gmra.mrb[0].mxu0 %v373
    %v491 = vpop.f32.mrb[0].mxu0
    %v492 = vadd.f32 %v418, %v491
    %v493 = vpop.f32.mrb[0].mxu0
    %v494 = vadd.f32 %v422, %v493
    %495 = vmatprep.mubr.f32.mxu0 0.0
    %496 = vmatmul.mubr.f32.gmra.mrb[0].mxu0 %v374
    %v497 = vpop.f32.mrb[0].mxu0
    %v498 = vadd.f32 %v418, %v497
    %v499 = vpop.f32.mrb[0].mxu0
    %v500 = vadd.f32 %v422, %v499
    %501 = vmatprep.mubr.f32.mxu0 0.0
    %502 = vmatmul.mubr.f32.gmra.mrb[0].mxu0 %v375
    %v503 = vpop.f32.mrb[0].mxu0
    %v504 = vadd.f32 %v418, %v503
    %v505 = vpop.f32.mrb[0].mxu0
    %v506 = vadd.f32 %v422, %v505
    %507 = vmatprep.mubr.f32.mxu0 0.0
    %508 = vmatmul.mubr.f32.gmra.mrb[0].mxu0 %v376
    %v509 = vpop.f32.mrb[0].mxu0
    %v510 = vadd.f32 %v418, %v509
    %v511 = vpop.f32.mrb[0].mxu0
    %v512 = vadd.f32 %v422, %v511
    %513 = vmatprep.mubr.f32.mxu0 0.0
    %514 = vmatmul.mubr.f32.gmra.mrb[0].mxu0 %v377
    %v515 = vpop.f32.mrb[0].mxu0
    %v516 = vadd.f32 %v418, %v515
    %v517 = vpop.f32.mrb[0].mxu0
    %v518 = vadd.f32 %v422, %v517
    %519 = vmatprep.mubr.f32.mxu0 0.0
    %520 = vmatmul.mubr.f32.gmra.mrb[0].mxu0 %v378
    %v521 = vpop.f32.mrb[0].mxu0
    %v522 = vadd.f32 %v418, %v521
    %v523 = vpop.f32.mrb[0].mxu0
    %v524 = vadd.f32 %v422, %v523
    %525 = vmatprep.mubr.f32.mxu0 0.0
    %526 = vmatmul.mubr.f32.gmra.mrb[0].mxu0 %v379
    %v527 = vpop.f32.mrb[0].mxu0
    %v528 = vadd.f32 %v418, %v527
    %v529 = vpop.f32.mrb[0].mxu0
    %v530 = vadd.f32 %v422, %v529
    %531 = vmatprep.mubr.f32.mxu0 0.0
    %532 = vmatmul.mubr.f32.gmra.mrb[0].mxu0 %v380
    %v533 = vpop.f32.mrb[0].mxu0
    %v534 = vadd.f32 %v418, %v533
    %v535 = vpop.f32.mrb[0].mxu0
    %v536 = vadd.f32 %v422, %v535
    %537 = vdwg.mxu0
    %v538 = vmax.f32 %v492, 0.0
    %v539 = vmax.f32 %v494, 0.0
    %v540 = vmax.f32 %v498, 0.0
    %v541 = vmax.f32 %v500, 0.0
    %v542 = vmax.f32 %v504, 0.0
    %v543 = vmax.f32 %v506, 0.0
    %v544 = vmax.f32 %v510, 0.0
    %v545 = vmax.f32 %v512, 0.0
    %v546 = vmax.f32 %v516, 0.0
    %v547 = vmax.f32 %v518, 0.0
    %v548 = vmax.f32 %v522, 0.0
    %v549 = vmax.f32 %v524, 0.0
    %v550 = vmax.f32 %v528, 0.0
    %v551 = vmax.f32 %v530, 0.0
    %v552 = vmax.f32 %v534, 0.0
    %v553 = vmax.f32 %v536, 0.0
    %v554 = vld [vmem:[#allocation8] sm:$0xff]
    %v555 = vld [vmem:[#allocation8 + $0x8] sm:$0xff]
    %v556 = vld [vmem:[#allocation8 + $0x10] sm:$0xff]
    %v557 = vld [vmem:[#allocation8 + $0x18] sm:$0xff]
    %v558 = vld [vmem:[#allocation8 + $0x20] sm:$0xff]
    %v559 = vld [vmem:[#allocation8 + $0x28] sm:$0xff]
    %v560 = vld [vmem:[#allocation8 + $0x30] sm:$0xff]
    %v561 = vld [vmem:[#allocation8 + $0x38] sm:$0xff]
    %v562 = vld [vmem:[#allocation8 + $0x40] sm:$0xff]
    %v563 = vld [vmem:[#allocation8 + $0x48] sm:$0xff]
    %v564 = vld [vmem:[#allocation8 + $0x50] sm:$0xff]
    %v565 = vld [vmem:[#allocation8 + $0x58] sm:$0xff]
    %v566 = vld [vmem:[#allocation8 + $0x60] sm:$0xff]
    %v567 = vld [vmem:[#allocation8 + $0x68] sm:$0xff]
    %v568 = vld [vmem:[#allocation8 + $0x70] sm:$0xff]
    %v569 = vld [vmem:[#allocation8 + $0x78] sm:$0xff]
    %v570 = vld [vmem:[#allocation8 + $0x80] sm:$0xff]
    %v571 = vld [vmem:[#allocation8 + $0x88] sm:$0xff]
    %v572 = vld [vmem:[#allocation8 + $0x90] sm:$0xff]
    %v573 = vld [vmem:[#allocation8 + $0x98] sm:$0xff]
    %v574 = vld [vmem:[#allocation8 + $0xa0] sm:$0xff]
    %v575 = vld [vmem:[#allocation8 + $0xa8] sm:$0xff]
    %v576 = vld [vmem:[#allocation8 + $0xb0] sm:$0xff]
    %v577 = vld [vmem:[#allocation8 + $0xb8] sm:$0xff]
    %v578 = vld [vmem:[#allocation8 + $0xc0] sm:$0xff]
    %v579 = vld [vmem:[#allocation8 + $0xc8] sm:$0xff]
    %v580 = vld [vmem:[#allocation8 + $0xd0] sm:$0xff]
    %v581 = vld [vmem:[#allocation8 + $0xd8] sm:$0xff]
    %v582 = vld [vmem:[#allocation8 + $0xe0] sm:$0xff]
    %v583 = vld [vmem:[#allocation8 + $0xe8] sm:$0xff]
    %v584 = vld [vmem:[#allocation8 + $0xf0] sm:$0xff]
    %v585 = vld [vmem:[#allocation8 + $0xf8] sm:$0xff]
    %v586 = vld [vmem:[%s7] sm:$0x1]
    %v588 = vlaneseq
    %v589 = vshrl.u32 %v588, 7
    %v590 = vsub.s32 0, %v589
    %v591 = vrot.slane %v586, %v590
    %593 = vmatprep.subr.mxu0 0.0
    %594 = vmatpush1.msra.mxu0 %v554
    %595 = vmatprep.subr.mxu0 0.0
    %596 = vmatpush1.msra.mxu0 %v555
    %597 = vmatprep.subr.mxu0 0.0
    %598 = vmatpush1.msra.mxu0 %v556
    %599 = vmatprep.subr.mxu0 0.0
    %600 = vmatpush1.msra.mxu0 %v557
    %601 = vmatprep.subr.mxu0 0.0
    %602 = vmatpush1.msra.mxu0 %v558
    %603 = vmatprep.subr.mxu0 0.0
    %604 = vmatpush1.msra.mxu0 %v559
    %605 = vmatprep.subr.mxu0 0.0
    %606 = vmatpush1.msra.mxu0 %v560
    %607 = vmatprep.subr.mxu0 0.0
    %608 = vmatpush1.msra.mxu0 %v561
    %609 = vmatprep.subr.mxu0 0.0
    %610 = vmatpush1.msra.mxu0 %v562
    %611 = vmatprep.subr.mxu0 0.0
    %612 = vmatpush1.msra.mxu0 %v563
    %613 = vmatprep.subr.mxu0 0.0
    %614 = vmatpush1.msra.mxu0 %v564
    %615 = vmatprep.subr.mxu0 0.0
    %616 = vmatpush1.msra.mxu0 %v565
    %617 = vmatprep.subr.mxu0 0.0
    %618 = vmatpush1.msra.mxu0 %v566
    %619 = vmatprep.subr.mxu0 0.0
    %620 = vmatpush1.msra.mxu0 %v567
    %621 = vmatprep.subr.mxu0 0.0
    %622 = vmatpush1.msra.mxu0 %v568
    %623 = vmatprep.subr.mxu0 0.0
    %624 = vmatpush1.msra.mxu0 %v569
    %625 = vmatprep.subr.mxu0 0.0
    %626 = vmatpush1.msra.mxu0 %v570
    %627 = vmatprep.subr.mxu0 0.0
    %628 = vmatpush1.msra.mxu0 %v571
    %629 = vmatprep.subr.mxu0 0.0
    %630 = vmatpush1.msra.mxu0 %v572
    %631 = vmatprep.subr.mxu0 0.0
    %632 = vmatpush1.msra.mxu0 %v573
    %633 = vmatprep.subr.mxu0 0.0
    %634 = vmatpush1.msra.mxu0 %v574
    %635 = vmatprep.subr.mxu0 0.0
    %636 = vmatpush1.msra.mxu0 %v575
    %637 = vmatprep.subr.mxu0 0.0
    %638 = vmatpush1.msra.mxu0 %v576
    %639 = vmatprep.subr.mxu0 0.0
    %640 = vmatpush1.msra.mxu0 %v577
    %641 = vmatprep.subr.mxu0 0.0
    %642 = vmatpush1.msra.mxu0 %v578
    %643 = vmatprep.subr.mxu0 0.0
    %644 = vmatpush1.msra.mxu0 %v579
    %645 = vmatprep.subr.mxu0 0.0
    %646 = vmatpush1.msra.mxu0 %v580
    %647 = vmatprep.subr.mxu0 0.0
    %648 = vmatpush1.msra.mxu0 %v581
    %649 = vmatprep.subr.mxu0 0.0
    %650 = vmatpush1.msra.mxu0 %v582
    %651 = vmatprep.subr.mxu0 0.0
    %652 = vmatpush1.msra.mxu0 %v583
    %653 = vmatprep.subr.mxu0 0.0
    %654 = vmatpush1.msra.mxu0 %v584
    %655 = vmatprep.subr.mxu0 0.0
    %656 = vmatpush1.msra.mxu0 %v585
    %657 = vmatprep.mubr.f32.mxu0 %v539
    %658 = vmatmul.mubr.f32.gmra.mrb[0].mxu0 %v538
    %v659 = vpop.f32.mrb[0].mxu0
    %v660 = vadd.f32 %v591, %v659
    %v661 = vpop.f32.mrb[0].mxu0
    %662 = vmatprep.mubr.f32.mxu0 %v541
    %663 = vmatmul.mubr.f32.gmra.mrb[0].mxu0 %v540
    %v664 = vpop.f32.mrb[0].mxu0
    %v665 = vadd.f32 %v591, %v664
    %v666 = vpop.f32.mrb[0].mxu0
    %667 = vmatprep.mubr.f32.mxu0 %v543
    %668 = vmatmul.mubr.f32.gmra.mrb[0].mxu0 %v542
    %v669 = vpop.f32.mrb[0].mxu0
    %v670 = vadd.f32 %v591, %v669
    %v671 = vpop.f32.mrb[0].mxu0
    %672 = vmatprep.mubr.f32.mxu0 %v545
    %673 = vmatmul.mubr.f32.gmra.mrb[0].mxu0 %v544
    %v674 = vpop.f32.mrb[0].mxu0
    %v675 = vadd.f32 %v591, %v674
    %v676 = vpop.f32.mrb[0].mxu0
    %677 = vmatprep.mubr.f32.mxu0 %v547
    %678 = vmatmul.mubr.f32.gmra.mrb[0].mxu0 %v546
    %v679 = vpop.f32.mrb[0].mxu0
    %v680 = vadd.f32 %v591, %v679
    %v681 = vpop.f32.mrb[0].mxu0
    %682 = vmatprep.mubr.f32.mxu0 %v549
    %683 = vmatmul.mubr.f32.gmra.mrb[0].mxu0 %v548
    %v684 = vpop.f32.mrb[0].mxu0
    %v685 = vadd.f32 %v591, %v684
    %v686 = vpop.f32.mrb[0].mxu0
    %687 = vmatprep.mubr.f32.mxu0 %v551
    %688 = vmatmul.mubr.f32.gmra.mrb[0].mxu0 %v550
    %v689 = vpop.f32.mrb[0].mxu0
    %v690 = vadd.f32 %v591, %v689
    %v691 = vpop.f32.mrb[0].mxu0
    %692 = vmatprep.mubr.f32.mxu0 %v553
    %693 = vmatmul.mubr.f32.gmra.mrb[0].mxu0 %v552
    %v694 = vpop.f32.mrb[0].mxu0
    %v695 = vadd.f32 %v591, %v694
    %v696 = vpop.f32.mrb[0].mxu0
    %697 = vdwg.mxu0
    %698 = vst [vmem:[#allocation10] sm:$0xff] %v660
    %699 = vst [vmem:[#allocation10 + $0x8] sm:$0xff] %v665
    %700 = vst [vmem:[#allocation10 + $0x10] sm:$0xff] %v670
    %701 = vst [vmem:[#allocation10 + $0x18] sm:$0xff] %v675
    %702 = vst [vmem:[#allocation10 + $0x20] sm:$0xff] %v680
    %703 = vst [vmem:[#allocation10 + $0x28] sm:$0xff] %v685
    %704 = vst [vmem:[#allocation10 + $0x30] sm:$0xff] %v690
    %705 = vst [vmem:[#allocation10 + $0x38] sm:$0xff] %v695
    // Predicated region
    $region50: #{tpu_custom_call.1} parent=1 // pred_check
      _
    $region51: #{tpu_custom_call.1} parent=1 // pred_check_branch
      %707 = sbr.rel (0) target = $region53
    $region52: #{tpu_custom_call.1} parent=1 // pred_region
      %s709 = ssub.s32 1024, 1024
      %710 = vsyncadd [#allocation4], %s709
      %s711 = sshll.u32 [#allocation10], 4
      %s712 = int_to_ptr.vmem [resolvable:$true] %s711
      %717 = dma.vmem_to_hbm [thread:$0]  %s712, 1024, %s8, [#allocation4], 128, 128, 8
    $region53: #{tpu_custom_call.1} parent=1 // pred_fallthru
      _
    // Predicated region
    $region54: #{tpu_custom_call.1} parent=1 // pred_check
      _
    $region55: #{tpu_custom_call.1} parent=1 // pred_check_branch
      %719 = sbr.rel (0) target = $region57
    $region56: #{tpu_custom_call.1} parent=1 // pred_region
      %720 = dma.done [#allocation4], 1024
    $region57: #{tpu_custom_call.1} parent=1 // pred_fallthru
      _
    %721 = vsyncpa [#allocation3], 1
    %722 = vsyncpa [#allocation6], 1
    %723 = vsyncpa [#allocation9], 1
    %724 = vsyncpa [#allocation4], 1

</llo_original>
